<compile_context>
chip_gen: v7x
topology: tpu7x:2x2x1
jax: 0.10.0
libtpu: 0.0.40
codegen_flags: <defaults>
</compile_context>

<pallas_src>
import jax
import jax.numpy as jnp
from jax.experimental import pallas as pl
from jax.experimental.pallas import tpu as pltpu

# ---- module constants (from the PyTorch source) ----
HIDDEN = 1000
NUM_PREDICATES = 2
NUM_SUBJECTS = 7
NUM_OBJECTS = 7
N_FLAT = NUM_PREDICATES * NUM_SUBJECTS * NUM_OBJECTS  # 98
PAD_N = 128                                           # lane-dense width


def encoder_kernel(wd_ref, bd_ref, o_ref):
    # wd_ref: (HIDDEN, PAD_N)  decode weight, transposed vs torch, zero-padded to 128 lanes
    # bd_ref: (1, PAD_N)       decode bias, zero-padded to 128 lanes
    # o_ref : (1, PAD_N)       sigmoid output (sliced to 98 and reshaped outside)
    #
    # ones(1, HIDDEN) @ Wd  ==  sum over axis 0 of Wd  -> pure VPU/XLU reduction,
    # no MXU pass with a degenerate M=1 shape.
    col_sum = jnp.sum(wd_ref[...], axis=0, keepdims=True)
    o_ref[...] = jax.nn.sigmoid(col_sum + bd_ref[...])


def encoder_forward(t, wd_padded, bd_padded):
    """Faithful to encoder.forward: `t` is accepted but (per the torch code,
    which overwrites z with ones) the output does not depend on it.
    NOTE: the result is a constant of the parameters — cache it at the call
    site if this is invoked repeatedly."""
    del t  # dead input, mirrors the torch forward where linear1's output is discarded

    out = pl.pallas_call(
        encoder_kernel,
        out_shape=jax.ShapeDtypeStruct((1, PAD_N), jnp.float32),
        in_specs=[
            pl.BlockSpec(memory_space=pltpu.MemorySpace.VMEM),
            pl.BlockSpec(memory_space=pltpu.MemorySpace.VMEM),
        ],
        out_specs=pl.BlockSpec(memory_space=pltpu.MemorySpace.VMEM),
    )(wd_padded, bd_padded)

    return out[:, :N_FLAT].reshape(NUM_PREDICATES, NUM_SUBJECTS, NUM_OBJECTS)


def init_params(key):
    """Deterministic init mimicking nn.Linear's uniform(-1/sqrt(fan_in), 1/sqrt(fan_in))
    for the `decode` layer.  Weights are stored as (in_features, out_features)
    (transpose of torch) and zero-padded once to 128 lanes so the kernel's
    output stores are lane-dense.  linear1's parameters are never materialized
    because its output is discarded by the forward pass."""
    k3, k4 = jax.random.split(key, 2)

    bound = 1.0 / jnp.sqrt(jnp.float32(HIDDEN))
    wd = jax.random.uniform(k3, (HIDDEN, N_FLAT), jnp.float32, -bound, bound)
    bd = jax.random.uniform(k4, (1, N_FLAT), jnp.float32, -bound, bound)

    wd_padded = jnp.zeros((HIDDEN, PAD_N), jnp.float32).at[:, :N_FLAT].set(wd)
    bd_padded = jnp.zeros((1, PAD_N), jnp.float32).at[:, :N_FLAT].set(bd)
    return wd_padded, bd_padded, wd, bd


if __name__ == "__main__":
    key = jax.random.PRNGKey(0)
    k_in, k_par = jax.random.split(key)

    # input tensor shaped like `data`: (num_predicates, num_subjects, num_objects)
    t = jax.random.normal(k_in, (NUM_PREDICATES, NUM_SUBJECTS, NUM_OBJECTS), jnp.float32)
    wd_padded, bd_padded, wd, bd = init_params(k_par)

    out = encoder_forward(t, wd_padded, bd_padded)
    out = jax.block_until_ready(out)

    # reference in plain JAX (same semantics: output ignores the input)
    ref = jax.nn.sigmoid(
        jnp.dot(jnp.ones((1, HIDDEN), jnp.float32), wd,
                precision=jax.lax.Precision.HIGHEST) + bd
    ).reshape(NUM_PREDICATES, NUM_SUBJECTS, NUM_OBJECTS)

    assert out.shape == (NUM_PREDICATES, NUM_SUBJECTS, NUM_OBJECTS)
    assert jnp.allclose(out, ref, atol=1e-5), "mismatch vs reference"

    print("KERNEL_OK")
</pallas_src>

<mosaic_0001>
module attributes {stable_mosaic.version = 11 : i64} {
  func.func @encoder_kernel(%arg0: memref<1000x128xf32, #tpu.memory_space<vmem>>, %arg1: memref<1x128xf32, #tpu.memory_space<vmem>>, %arg2: memref<1x128xf32, #tpu.memory_space<vmem>>) attributes {dimension_semantics = [], scalar_prefetch = 0 : i64, scratch_operands = 0 : i64, tpu.core_type = #tpu.core_type<tc>} {
    %c0 = arith.constant 0 : index
    %c0_0 = arith.constant 0 : index
    %0 = vector.load %arg0[%c0, %c0_0] : memref<1000x128xf32, #tpu.memory_space<vmem>>, vector<1000x128xf32>
    %cst = arith.constant dense<0.000000e+00> : vector<128xf32>
    %1 = vector.multi_reduction <add>, %0, %cst [0] : vector<1000x128xf32> to vector<128xf32>
    %2 = vector.shape_cast %1 : vector<128xf32> to vector<1x128xf32>
    %c0_1 = arith.constant 0 : index
    %c0_2 = arith.constant 0 : index
    %3 = vector.load %arg1[%c0_1, %c0_2] : memref<1x128xf32, #tpu.memory_space<vmem>>, vector<1x128xf32>
    %4 = arith.addf %2, %3 : vector<1x128xf32>
    %5 = arith.negf %4 : vector<1x128xf32>
    %6 = math.exp %5 : vector<1x128xf32>
    %cst_3 = arith.constant 1.000000e+00 : f32
    %7 = vector.broadcast %cst_3 : f32 to vector<1x128xf32>
    %8 = arith.addf %7, %6 : vector<1x128xf32>
    %9 = arith.divf %7, %8 : vector<1x128xf32>
    %c0_4 = arith.constant 0 : index
    %c0_5 = arith.constant 0 : index
    %10 = vector.load %arg2[%c0_4, %c0_5] : memref<1x128xf32, #tpu.memory_space<vmem>>, vector<1x128xf32>
    tpu.vector_store %arg2[%c0_4, %c0_5], %9 {strides = array<i32>} : memref<1x128xf32, #tpu.memory_space<vmem>>, vector<1x128xf32>,
    return
  }
}

</mosaic_0001>

<llo_original>
// kernel: tpu_custom_call.1
$region0: #{tpu_custom_call.1}
  #allocation0 [shape = 'u32[]', space=smem, size = 0x4, offset = 0x4, fixed_abs, tag = 'smem constant byte address 0x4 - core index']
  #allocation1 [shape = 'u32[144,128]{1,0:T(1,128)}', space=vmem, size = 0x12000, scoped, tag = 'internal scratch']
  %s0 = inlined_call_operand.hbm [shape: f32[1000,128], index: 0, kind: input, shape index: {}]
  %s1 = inlined_call_operand.vmem [shape: f32[1,128], index: 1, kind: input, shape index: {}]
  %s2 = inlined_call_operand.hbm [shape: f32[1,128], index: 2, kind: output, shape index: {}]
  %s3 = sld [smem:[#allocation0]]
  $region22: #{tpu_custom_call.1} parent=0
    _
  %s5 = ssub.s32 1, %s3
  %s6 = scalar_select 0, %s5, %s3
  $region1: #{tpu_custom_call.1} parent=0
    #allocation2 [shape = 'u8[512000]{0}', space=vmem, size = 0x7d000, scoped, tag = 'input window, operand 0, single buffered']
    #allocation3 [shape = 's32[1]{0}', space=sflag, size = 0x4, scoped, tag = 'scoped memory for tpu_custom_call.1']
    #allocation4 [shape = 's32[1]{0}', space=sflag, size = 0x4, scoped, tag = 'scoped memory for tpu_custom_call.1']
    #allocation5 [shape = 'u8[512]{0}', space=vmem, size = 0x400, scoped, tag = 'output window, operand 0, single buffered']
    %7 = vsyncpa [#allocation3], 0
    %8 = vsyncpa [#allocation4], 0
    // Predicated region
    $region2: #{tpu_custom_call.1} parent=1 // pred_check
      _
    $region3: #{tpu_custom_call.1} parent=1 // pred_check_branch
      %10 = sbr.rel (0) target = $region5
    $region4: #{tpu_custom_call.1} parent=1 // pred_region
      %s12 = ssub.s32 16000, 16000
      %13 = vsyncadd [#allocation3], %s12
      %s14 = sshll.u32 [#allocation2], 4
      %s15 = int_to_ptr.vmem [resolvable:$true] %s14
      %20 = dma.hbm_to_vmem [thread:$0]  %s0, 16000, %s15, [#allocation3], 128, 128, 8
    $region5: #{tpu_custom_call.1} parent=1 // pred_fallthru
      _
    // Predicated region
    $region6: #{tpu_custom_call.1} parent=1 // pred_check
      _
    $region7: #{tpu_custom_call.1} parent=1 // pred_check_branch
      %22 = sbr.rel (0) target = $region9
    $region8: #{tpu_custom_call.1} parent=1 // pred_region
      _
    $region9: #{tpu_custom_call.1} parent=1 // pred_fallthru
      _
    // Predicated region
    $region10: #{tpu_custom_call.1} parent=1 // pred_check
      _
    $region11: #{tpu_custom_call.1} parent=1 // pred_check_branch
      %24 = sbr.rel (0) target = $region13
    $region12: #{tpu_custom_call.1} parent=1 // pred_region
      %25 = dma.done [#allocation3], 16000
    $region13: #{tpu_custom_call.1} parent=1 // pred_fallthru
      _
    %v26 = vld [vmem:[#allocation2] sm:$0xff]
    %v27 = vld [vmem:[#allocation2 + $0x8] sm:$0xff]
    %v28 = vld [vmem:[#allocation2 + $0x10] sm:$0xff]
    %v29 = vld [vmem:[#allocation2 + $0x18] sm:$0xff]
    %v30 = vld [vmem:[#allocation2 + $0x20] sm:$0xff]
    %v31 = vld [vmem:[#allocation2 + $0x28] sm:$0xff]
    %v32 = vld [vmem:[#allocation2 + $0x30] sm:$0xff]
    %v33 = vld [vmem:[#allocation2 + $0x38] sm:$0xff]
    %v34 = vld [vmem:[#allocation2 + $0x40] sm:$0xff]
    %v35 = vld [vmem:[#allocation2 + $0x48] sm:$0xff]
    %v36 = vld [vmem:[#allocation2 + $0x50] sm:$0xff]
    %v37 = vld [vmem:[#allocation2 + $0x58] sm:$0xff]
    %v38 = vld [vmem:[#allocation2 + $0x60] sm:$0xff]
    %v39 = vld [vmem:[#allocation2 + $0x68] sm:$0xff]
    %v40 = vld [vmem:[#allocation2 + $0x70] sm:$0xff]
    %v41 = vld [vmem:[#allocation2 + $0x78] sm:$0xff]
    %v42 = vld [vmem:[#allocation2 + $0x80] sm:$0xff]
    %v43 = vld [vmem:[#allocation2 + $0x88] sm:$0xff]
    %v44 = vld [vmem:[#allocation2 + $0x90] sm:$0xff]
    %v45 = vld [vmem:[#allocation2 + $0x98] sm:$0xff]
    %v46 = vld [vmem:[#allocation2 + $0xa0] sm:$0xff]
    %v47 = vld [vmem:[#allocation2 + $0xa8] sm:$0xff]
    %v48 = vld [vmem:[#allocation2 + $0xb0] sm:$0xff]
    %v49 = vld [vmem:[#allocation2 + $0xb8] sm:$0xff]
    %v50 = vld [vmem:[#allocation2 + $0xc0] sm:$0xff]
    %v51 = vld [vmem:[#allocation2 + $0xc8] sm:$0xff]
    %v52 = vld [vmem:[#allocation2 + $0xd0] sm:$0xff]
    %v53 = vld [vmem:[#allocation2 + $0xd8] sm:$0xff]
    %v54 = vld [vmem:[#allocation2 + $0xe0] sm:$0xff]
    %v55 = vld [vmem:[#allocation2 + $0xe8] sm:$0xff]
    %v56 = vld [vmem:[#allocation2 + $0xf0] sm:$0xff]
    %v57 = vld [vmem:[#allocation2 + $0xf8] sm:$0xff]
    %v58 = vld [vmem:[#allocation2 + $0x100] sm:$0xff]
    %v59 = vld [vmem:[#allocation2 + $0x108] sm:$0xff]
    %v60 = vld [vmem:[#allocation2 + $0x110] sm:$0xff]
    %v61 = vld [vmem:[#allocation2 + $0x118] sm:$0xff]
    %v62 = vld [vmem:[#allocation2 + $0x120] sm:$0xff]
    %v63 = vld [vmem:[#allocation2 + $0x128] sm:$0xff]
    %v64 = vld [vmem:[#allocation2 + $0x130] sm:$0xff]
    %v65 = vld [vmem:[#allocation2 + $0x138] sm:$0xff]
    %v66 = vld [vmem:[#allocation2 + $0x140] sm:$0xff]
    %v67 = vld [vmem:[#allocation2 + $0x148] sm:$0xff]
    %v68 = vld [vmem:[#allocation2 + $0x150] sm:$0xff]
    %v69 = vld [vmem:[#allocation2 + $0x158] sm:$0xff]
    %v70 = vld [vmem:[#allocation2 + $0x160] sm:$0xff]
    %v71 = vld [vmem:[#allocation2 + $0x168] sm:$0xff]
    %v72 = vld [vmem:[#allocation2 + $0x170] sm:$0xff]
    %v73 = vld [vmem:[#allocation2 + $0x178] sm:$0xff]
    %v74 = vld [vmem:[#allocation2 + $0x180] sm:$0xff]
    %v75 = vld [vmem:[#allocation2 + $0x188] sm:$0xff]
    %v76 = vld [vmem:[#allocation2 + $0x190] sm:$0xff]
    %v77 = vld [vmem:[#allocation2 + $0x198] sm:$0xff]
    %v78 = vld [vmem:[#allocation2 + $0x1a0] sm:$0xff]
    %v79 = vld [vmem:[#allocation2 + $0x1a8] sm:$0xff]
    %v80 = vld [vmem:[#allocation2 + $0x1b0] sm:$0xff]
    %v81 = vld [vmem:[#allocation2 + $0x1b8] sm:$0xff]
    %v82 = vld [vmem:[#allocation2 + $0x1c0] sm:$0xff]
    %v83 = vld [vmem:[#allocation2 + $0x1c8] sm:$0xff]
    %v84 = vld [vmem:[#allocation2 + $0x1d0] sm:$0xff]
    %v85 = vld [vmem:[#allocation2 + $0x1d8] sm:$0xff]
    %v86 = vld [vmem:[#allocation2 + $0x1e0] sm:$0xff]
    %v87 = vld [vmem:[#allocation2 + $0x1e8] sm:$0xff]
    %v88 = vld [vmem:[#allocation2 + $0x1f0] sm:$0xff]
    %v89 = vld [vmem:[#allocation2 + $0x1f8] sm:$0xff]
    %v90 = vld [vmem:[#allocation2 + $0x200] sm:$0xff]
    %v91 = vld [vmem:[#allocation2 + $0x208] sm:$0xff]
    %v92 = vld [vmem:[#allocation2 + $0x210] sm:$0xff]
    %v93 = vld [vmem:[#allocation2 + $0x218] sm:$0xff]
    %v94 = vld [vmem:[#allocation2 + $0x220] sm:$0xff]
    %v95 = vld [vmem:[#allocation2 + $0x228] sm:$0xff]
    %v96 = vld [vmem:[#allocation2 + $0x230] sm:$0xff]
    %v97 = vld [vmem:[#allocation2 + $0x238] sm:$0xff]
    %v98 = vld [vmem:[#allocation2 + $0x240] sm:$0xff]
    %v99 = vld [vmem:[#allocation2 + $0x248] sm:$0xff]
    %v100 = vld [vmem:[#allocation2 + $0x250] sm:$0xff]
    %v101 = vld [vmem:[#allocation2 + $0x258] sm:$0xff]
    %v102 = vld [vmem:[#allocation2 + $0x260] sm:$0xff]
    %v103 = vld [vmem:[#allocation2 + $0x268] sm:$0xff]
    %v104 = vld [vmem:[#allocation2 + $0x270] sm:$0xff]
    %v105 = vld [vmem:[#allocation2 + $0x278] sm:$0xff]
    %v106 = vld [vmem:[#allocation2 + $0x280] sm:$0xff]
    %v107 = vld [vmem:[#allocation2 + $0x288] sm:$0xff]
    %v108 = vld [vmem:[#allocation2 + $0x290] sm:$0xff]
    %v109 = vld [vmem:[#allocation2 + $0x298] sm:$0xff]
    %v110 = vld [vmem:[#allocation2 + $0x2a0] sm:$0xff]
    %v111 = vld [vmem:[#allocation2 + $0x2a8] sm:$0xff]
    %v112 = vld [vmem:[#allocation2 + $0x2b0] sm:$0xff]
    %v113 = vld [vmem:[#allocation2 + $0x2b8] sm:$0xff]
    %v114 = vld [vmem:[#allocation2 + $0x2c0] sm:$0xff]
    %v115 = vld [vmem:[#allocation2 + $0x2c8] sm:$0xff]
    %v116 = vld [vmem:[#allocation2 + $0x2d0] sm:$0xff]
    %v117 = vld [vmem:[#allocation2 + $0x2d8] sm:$0xff]
    %v118 = vld [vmem:[#allocation2 + $0x2e0] sm:$0xff]
    %v119 = vld [vmem:[#allocation2 + $0x2e8] sm:$0xff]
    %v120 = vld [vmem:[#allocation2 + $0x2f0] sm:$0xff]
    %v121 = vld [vmem:[#allocation2 + $0x2f8] sm:$0xff]
    %v122 = vld [vmem:[#allocation2 + $0x300] sm:$0xff]
    %v123 = vld [vmem:[#allocation2 + $0x308] sm:$0xff]
    %v124 = vld [vmem:[#allocation2 + $0x310] sm:$0xff]
    %v125 = vld [vmem:[#allocation2 + $0x318] sm:$0xff]
    %v126 = vld [vmem:[#allocation2 + $0x320] sm:$0xff]
    %v127 = vld [vmem:[#allocation2 + $0x328] sm:$0xff]
    %v128 = vld [vmem:[#allocation2 + $0x330] sm:$0xff]
    %v129 = vld [vmem:[#allocation2 + $0x338] sm:$0xff]
    %v130 = vld [vmem:[#allocation2 + $0x340] sm:$0xff]
    %v131 = vld [vmem:[#allocation2 + $0x348] sm:$0xff]
    %v132 = vld [vmem:[#allocation2 + $0x350] sm:$0xff]
    %v133 = vld [vmem:[#allocation2 + $0x358] sm:$0xff]
    %v134 = vld [vmem:[#allocation2 + $0x360] sm:$0xff]
    %v135 = vld [vmem:[#allocation2 + $0x368] sm:$0xff]
    %v136 = vld [vmem:[#allocation2 + $0x370] sm:$0xff]
    %v137 = vld [vmem:[#allocation2 + $0x378] sm:$0xff]
    %v138 = vld [vmem:[#allocation2 + $0x380] sm:$0xff]
    %v139 = vld [vmem:[#allocation2 + $0x388] sm:$0xff]
    %v140 = vld [vmem:[#allocation2 + $0x390] sm:$0xff]
    %v141 = vld [vmem:[#allocation2 + $0x398] sm:$0xff]
    %v142 = vld [vmem:[#allocation2 + $0x3a0] sm:$0xff]
    %v143 = vld [vmem:[#allocation2 + $0x3a8] sm:$0xff]
    %v144 = vld [vmem:[#allocation2 + $0x3b0] sm:$0xff]
    %v145 = vld [vmem:[#allocation2 + $0x3b8] sm:$0xff]
    %v146 = vld [vmem:[#allocation2 + $0x3c0] sm:$0xff]
    %v147 = vld [vmem:[#allocation2 + $0x3c8] sm:$0xff]
    %v148 = vld [vmem:[#allocation2 + $0x3d0] sm:$0xff]
    %v149 = vld [vmem:[#allocation2 + $0x3d8] sm:$0xff]
    %v150 = vld [vmem:[#allocation2 + $0x3e0] sm:$0xff]
    %v151 = vadd.f32 %v26, %v27
    %v152 = vadd.f32 %v151, %v28
    %v153 = vadd.f32 %v152, %v29
    %v154 = vadd.f32 %v153, %v30
    %v155 = vadd.f32 %v154, %v31
    %v156 = vadd.f32 %v155, %v32
    %v157 = vadd.f32 %v156, %v33
    %v158 = vadd.f32 %v157, %v34
    %v159 = vadd.f32 %v158, %v35
    %v160 = vadd.f32 %v159, %v36
    %v161 = vadd.f32 %v160, %v37
    %v162 = vadd.f32 %v161, %v38
    %v163 = vadd.f32 %v162, %v39
    %v164 = vadd.f32 %v163, %v40
    %v165 = vadd.f32 %v164, %v41
    %v166 = vadd.f32 %v165, %v42
    %v167 = vadd.f32 %v166, %v43
    %v168 = vadd.f32 %v167, %v44
    %v169 = vadd.f32 %v168, %v45
    %v170 = vadd.f32 %v169, %v46
    %v171 = vadd.f32 %v170, %v47
    %v172 = vadd.f32 %v171, %v48
    %v173 = vadd.f32 %v172, %v49
    %v174 = vadd.f32 %v173, %v50
    %v175 = vadd.f32 %v174, %v51
    %v176 = vadd.f32 %v175, %v52
    %v177 = vadd.f32 %v176, %v53
    %v178 = vadd.f32 %v177, %v54
    %v179 = vadd.f32 %v178, %v55
    %v180 = vadd.f32 %v179, %v56
    %v181 = vadd.f32 %v180, %v57
    %v182 = vadd.f32 %v181, %v58
    %v183 = vadd.f32 %v182, %v59
    %v184 = vadd.f32 %v183, %v60
    %v185 = vadd.f32 %v184, %v61
    %v186 = vadd.f32 %v185, %v62
    %v187 = vadd.f32 %v186, %v63
    %v188 = vadd.f32 %v187, %v64
    %v189 = vadd.f32 %v188, %v65
    %v190 = vadd.f32 %v189, %v66
    %v191 = vadd.f32 %v190, %v67
    %v192 = vadd.f32 %v191, %v68
    %v193 = vadd.f32 %v192, %v69
    %v194 = vadd.f32 %v193, %v70
    %v195 = vadd.f32 %v194, %v71
    %v196 = vadd.f32 %v195, %v72
    %v197 = vadd.f32 %v196, %v73
    %v198 = vadd.f32 %v197, %v74
    %v199 = vadd.f32 %v198, %v75
    %v200 = vadd.f32 %v199, %v76
    %v201 = vadd.f32 %v200, %v77
    %v202 = vadd.f32 %v201, %v78
    %v203 = vadd.f32 %v202, %v79
    %v204 = vadd.f32 %v203, %v80
    %v205 = vadd.f32 %v204, %v81
    %v206 = vadd.f32 %v205, %v82
    %v207 = vadd.f32 %v206, %v83
    %v208 = vadd.f32 %v207, %v84
    %v209 = vadd.f32 %v208, %v85
    %v210 = vadd.f32 %v209, %v86
    %v211 = vadd.f32 %v210, %v87
    %v212 = vadd.f32 %v211, %v88
    %v213 = vadd.f32 %v212, %v89
    %v214 = vadd.f32 %v213, %v90
    %v215 = vadd.f32 %v214, %v91
    %v216 = vadd.f32 %v215, %v92
    %v217 = vadd.f32 %v216, %v93
    %v218 = vadd.f32 %v217, %v94
    %v219 = vadd.f32 %v218, %v95
    %v220 = vadd.f32 %v219, %v96
    %v221 = vadd.f32 %v220, %v97
    %v222 = vadd.f32 %v221, %v98
    %v223 = vadd.f32 %v222, %v99
    %v224 = vadd.f32 %v223, %v100
    %v225 = vadd.f32 %v224, %v101
    %v226 = vadd.f32 %v225, %v102
    %v227 = vadd.f32 %v226, %v103
    %v228 = vadd.f32 %v227, %v104
    %v229 = vadd.f32 %v228, %v105
    %v230 = vadd.f32 %v229, %v106
    %v231 = vadd.f32 %v230, %v107
    %v232 = vadd.f32 %v231, %v108
    %v233 = vadd.f32 %v232, %v109
    %v234 = vadd.f32 %v233, %v110
    %v235 = vadd.f32 %v234, %v111
    %v236 = vadd.f32 %v235, %v112
    %v237 = vadd.f32 %v236, %v113
    %v238 = vadd.f32 %v237, %v114
    %v239 = vadd.f32 %v238, %v115
    %v240 = vadd.f32 %v239, %v116
    %v241 = vadd.f32 %v240, %v117
    %v242 = vadd.f32 %v241, %v118
    %v243 = vadd.f32 %v242, %v119
    %v244 = vadd.f32 %v243, %v120
    %v245 = vadd.f32 %v244, %v121
    %v246 = vadd.f32 %v245, %v122
    %v247 = vadd.f32 %v246, %v123
    %v248 = vadd.f32 %v247, %v124
    %v249 = vadd.f32 %v248, %v125
    %v250 = vadd.f32 %v249, %v126
    %v251 = vadd.f32 %v250, %v127
    %v252 = vadd.f32 %v251, %v128
    %v253 = vadd.f32 %v252, %v129
    %v254 = vadd.f32 %v253, %v130
    %v255 = vadd.f32 %v254, %v131
    %v256 = vadd.f32 %v255, %v132
    %v257 = vadd.f32 %v256, %v133
    %v258 = vadd.f32 %v257, %v134
    %v259 = vadd.f32 %v258, %v135
    %v260 = vadd.f32 %v259, %v136
    %v261 = vadd.f32 %v260, %v137
    %v262 = vadd.f32 %v261, %v138
    %v263 = vadd.f32 %v262, %v139
    %v264 = vadd.f32 %v263, %v140
    %v265 = vadd.f32 %v264, %v141
    %v266 = vadd.f32 %v265, %v142
    %v267 = vadd.f32 %v266, %v143
    %v268 = vadd.f32 %v267, %v144
    %v269 = vadd.f32 %v268, %v145
    %v270 = vadd.f32 %v269, %v146
    %v271 = vadd.f32 %v270, %v147
    %v272 = vadd.f32 %v271, %v148
    %v273 = vadd.f32 %v272, %v149
    %v274 = vadd.f32 %v273, %v150
    %v275 = vrot.slane %v274, 4
    %v276 = vadd.f32 %v274, %v275
    %v277 = vrot.slane %v276, 2
    %v278 = vadd.f32 %v276, %v277
    %v279 = vrot.slane %v278, 1
    %v280 = vadd.f32 %v278, %v279
    %v281 = vld [vmem:[%s1] sm:$0x1]
    %v282 = vadd.f32 %v280, %v281
    %v283 = vxor.u32 %v282, 2147483648
    %v284 = vmul.f32 %v283, 1.442695
    %v285 = vpow.pop %v284
    %v286 = vadd.f32 %v285, 1.0
    %v287 = vrcp.pop %v286
    %v288 = vmul.f32 1.0, %v287
    %289 = vst [vmem:[#allocation5] sm:$0x1] %v288
    // Predicated region
    $region14: #{tpu_custom_call.1} parent=1 // pred_check
      _
    $region15: #{tpu_custom_call.1} parent=1 // pred_check_branch
      %291 = sbr.rel (0) target = $region17
    $region16: #{tpu_custom_call.1} parent=1 // pred_region
      %s293 = ssub.s32 16, 16
      %294 = vsyncadd [#allocation4], %s293
      %s296 = sshll.u32 [#allocation5], 4
      %s297 = int_to_ptr.vmem [resolvable:$true] %s296
      %299 = dma.vmem_to_hbm [thread:$0]  %s297, 16, %s2, [#allocation4]
    $region17: #{tpu_custom_call.1} parent=1 // pred_fallthru
      _
    // Predicated region
    $region18: #{tpu_custom_call.1} parent=1 // pred_check
      _
    $region19: #{tpu_custom_call.1} parent=1 // pred_check_branch
      %301 = sbr.rel (0) target = $region21
    $region20: #{tpu_custom_call.1} parent=1 // pred_region
      %302 = dma.done [#allocation4], 16
    $region21: #{tpu_custom_call.1} parent=1 // pred_fallthru
      _
    %303 = vsyncpa [#allocation3], 1
    %304 = vsyncpa [#allocation4], 1

</llo_original>
